<compile_context>
chip_gen: v5e
topology: v5e:2x2
jax: 0.10.0
libtpu: 0.0.40
codegen_flags: <defaults>
</compile_context>

<pallas_src>
import math

import jax
import jax.numpy as jnp
from jax.experimental import pallas as pl
from jax.experimental.pallas import tpu as pltpu


def _round_up(n, m):
    return ((n + m - 1) // m) * m


def _posemb_kernel(x_ref, w_ref, out_ref):
    # x_ref:   (1, TB)          f32  -- batch on the lane axis (lane-dense)
    # w_ref:   (half_dim, 1)    f32
    # out_ref: (2*half_dim, TB) f32  -- rows [0:hd] = sin, rows [hd:2hd] = cos
    half_dim = w_ref.shape[0]
    w2pi = w_ref[...] * (2.0 * math.pi)        # tiny (half_dim, 1) vreg multiply
    theta = w2pi * x_ref[...]                  # (half_dim, TB) via VPU broadcasts
    out_ref[:half_dim, :] = jnp.sin(theta)     # EUP; unmasked lane-dense stores
    out_ref[half_dim:, :] = jnp.cos(theta)


def random_or_learned_sinusoidal_pos_emb(x, weights):
    """x: (B,) float, weights: (half_dim,) float -> (B, 1 + 2*half_dim) float32.

    Matches PyTorch:
        x = rearrange(x, 'b -> b 1')
        freqs = x * weights[None, :] * 2*pi
        return cat([x, sin(freqs), cos(freqs)], dim=-1)
    """
    B = x.shape[0]
    half_dim = weights.shape[0]

    x2 = x.reshape(B, 1).astype(jnp.float32)                 # pass-through column
    x_row = x2.reshape(1, B)                                  # lane-dense input
    w_col = weights.reshape(half_dim, 1).astype(jnp.float32)

    # One big step unless B is large enough to be worth splitting across
    # v7x's two TensorCores ("parallel" grid axis).
    num_tiles = 2 if B >= 512 else 1
    tb = _round_up(pl.cdiv(B, num_tiles), 128)
    b_pad = tb * num_tiles
    if b_pad != B:
        x_row = jnp.pad(x_row, ((0, 0), (0, b_pad - B)))

    sincos = pl.pallas_call(
        _posemb_kernel,
        out_shape=jax.ShapeDtypeStruct((2 * half_dim, b_pad), jnp.float32),
        grid=(num_tiles,),
        in_specs=[
            pl.BlockSpec((1, tb), lambda i: (0, i)),
            pl.BlockSpec((half_dim, 1), lambda i: (0, 0)),
        ],
        out_specs=pl.BlockSpec((2 * half_dim, tb), lambda i: (0, i)),
        compiler_params=pltpu.CompilerParams(
            dimension_semantics=("parallel",),
        ),
    )(x_row, w_col)

    # Undo the transpose + attach the x column (cheap XLA data movement).
    fouriered = sincos[:, :B].T                               # (B, 2*half_dim)
    return jnp.concatenate([x2, fouriered], axis=-1)


def _reference(x, weights):
    x2 = x.reshape(-1, 1).astype(jnp.float32)
    freqs = x2 * weights.reshape(1, -1).astype(jnp.float32) * 2.0 * math.pi
    return jnp.concatenate([x2, jnp.sin(freqs), jnp.cos(freqs)], axis=-1)


if __name__ == "__main__":
    key = jax.random.PRNGKey(0)
    k_w, k_x = jax.random.split(key)

    dim = 32                       # module's `dim`, must be even
    half_dim = dim // 2
    B = 8                          # small batch of timesteps

    # Deterministic "parameter" (same shape as nn.Parameter(torch.randn(half_dim))).
    weights = jax.random.normal(k_w, (half_dim,), dtype=jnp.float32)
    # Continuous diffusion timesteps in [0, 1) -- the module's actual input regime.
    x = jax.random.uniform(k_x, (B,), dtype=jnp.float32)

    out = random_or_learned_sinusoidal_pos_emb(x, weights)
    out = jax.block_until_ready(out)

    ref = _reference(x, weights)
    assert out.shape == (B, 1 + dim), out.shape
    assert jnp.allclose(out, ref, atol=1e-3, rtol=1e-3), "mismatch vs reference"

    print("KERNEL_OK")
</pallas_src>

<mosaic_0001>
module attributes {stable_mosaic.version = 11 : i64} {
  func.func @_posemb_kernel(%arg0: i32, %arg1: memref<1x128xf32, #tpu.memory_space<vmem>>, %arg2: memref<16x1xf32, #tpu.memory_space<vmem>>, %arg3: memref<32x128xf32, #tpu.memory_space<vmem>>) attributes {dimension_semantics = [#tpu.dimension_semantics<parallel>], iteration_bounds = array<i64: 1>, scalar_prefetch = 0 : i64, scratch_operands = 0 : i64, tpu.core_type = #tpu.core_type<tc>, window_params = [{transform_indices = @transform_0, window_bounds = array<i64: 1, 128>}, {pipeline_mode = #tpu.pipeline_mode<synchronous>, transform_indices = @transform_1, window_bounds = array<i64: 16, 1>}, {transform_indices = @transform_2, window_bounds = array<i64: 32, 128>}]} {
    %c0 = arith.constant 0 : index
    %c0_0 = arith.constant 0 : index
    %0 = vector.load %arg2[%c0, %c0_0] : memref<16x1xf32, #tpu.memory_space<vmem>>, vector<16x1xf32>
    %cst = arith.constant 6.28318548 : f32
    %1 = vector.broadcast %cst : f32 to vector<16x1xf32>
    %2 = arith.mulf %0, %1 : vector<16x1xf32>
    %c0_1 = arith.constant 0 : index
    %c0_2 = arith.constant 0 : index
    %3 = vector.load %arg1[%c0_1, %c0_2] : memref<1x128xf32, #tpu.memory_space<vmem>>, vector<1x128xf32>
    %4 = vector.broadcast %2 : vector<16x1xf32> to vector<16x128xf32>
    %5 = vector.broadcast %3 : vector<1x128xf32> to vector<16x128xf32>
    %6 = arith.mulf %4, %5 : vector<16x128xf32>
    %7 = math.sin %6 : vector<16x128xf32>
    %c0_3 = arith.constant 0 : index
    %c0_4 = arith.constant 0 : index
    %8 = vector.load %arg3[%c0_3, %c0_4] : memref<32x128xf32, #tpu.memory_space<vmem>>, vector<16x128xf32>
    tpu.vector_store %arg3[%c0_3, %c0_4], %7 {strides = array<i32>} : memref<32x128xf32, #tpu.memory_space<vmem>>, vector<16x128xf32>,
    %9 = math.cos %6 : vector<16x128xf32>
    %c16 = arith.constant 16 : index
    %c0_5 = arith.constant 0 : index
    %10 = vector.load %arg3[%c16, %c0_5] : memref<32x128xf32, #tpu.memory_space<vmem>>, vector<16x128xf32>
    tpu.vector_store %arg3[%c16, %c0_5], %9 {strides = array<i32>} : memref<32x128xf32, #tpu.memory_space<vmem>>, vector<16x128xf32>,
    return
  }
  func.func @transform_0(%arg0: i32) -> (i32, i32) {
    %c0_i32 = arith.constant 0 : i32
    %c0_i32_0 = arith.constant 0 : i32
    return %c0_i32, %arg0 : i32, i32
  }
  func.func @transform_1(%arg0: i32) -> (i32, i32) {
    %c0_i32 = arith.constant 0 : i32
    %c0_i32_0 = arith.constant 0 : i32
    %c0_i32_1 = arith.constant 0 : i32
    return %c0_i32, %c0_i32_0 : i32, i32
  }
  func.func @transform_2(%arg0: i32) -> (i32, i32) {
    %c0_i32 = arith.constant 0 : i32
    %c0_i32_0 = arith.constant 0 : i32
    return %c0_i32, %arg0 : i32, i32
  }
}

</mosaic_0001>

<llo_original>
// kernel: tpu_custom_call.1
$region0: #{tpu_custom_call.1}
  #allocation0 [shape = 'u32[]', space=smem, size = 0x4, offset = 0x4, fixed_abs, tag = 'smem constant byte address 0x4 - core index']
  #allocation1 [shape = 'u32[72,128]{1,0:T(1,128)}', space=vmem, size = 0x9000, scoped, tag = 'internal scratch']
  %s0 = inlined_call_operand.vmem [shape: f32[1,128], index: 0, kind: input, shape index: {}]
  %s1 = inlined_call_operand.vmem [shape: f32[16,1], index: 1, kind: input, shape index: {}]
  %s2 = inlined_call_operand.hbm [shape: f32[32,128], index: 2, kind: output, shape index: {}]
  %s3 = sld [smem:[#allocation0]]
  $region18: #{tpu_custom_call.1} parent=0
    _
  %s5 = ssub.s32 1, %s3
  %s6 = scalar_select 0, %s5, %s3
  $region1: #{tpu_custom_call.1} parent=0
    #allocation2 [shape = 'u8[16384]{0}', space=vmem, size = 0x4000, scoped, tag = 'output window, operand 0, single buffered']
    #allocation3 [shape = 's32[1]{0}', space=sflag, size = 0x4, scoped, tag = 'scoped memory for tpu_custom_call.1']
    %7 = vsyncpa [#allocation3], 0
    // Predicated region
    $region2: #{tpu_custom_call.1} parent=1 // pred_check
      _
    $region3: #{tpu_custom_call.1} parent=1 // pred_check_branch
      %9 = sbr.rel (0) target = $region5
    $region4: #{tpu_custom_call.1} parent=1 // pred_region
      _
    $region5: #{tpu_custom_call.1} parent=1 // pred_fallthru
      _
    // Predicated region
    $region6: #{tpu_custom_call.1} parent=1 // pred_check
      _
    $region7: #{tpu_custom_call.1} parent=1 // pred_check_branch
      %11 = sbr.rel (0) target = $region9
    $region8: #{tpu_custom_call.1} parent=1 // pred_region
      _
    $region9: #{tpu_custom_call.1} parent=1 // pred_fallthru
      _
    %v12 = vld [vmem:[%s1] sm:$0xff]
    %v13 = vld [vmem:[%s1 + $0x8] sm:$0xff]
    %v14 = vmul.f32 %v12, 6.2831855
    %v15 = vmul.f32 %v13, 6.2831855
    %v16 = vld [vmem:[%s0] sm:$0x1]
    %18 = vset.pattern.permute.xlu0 0
    %19 = vperm.xlu0 %18, %v14
    %v20 = vpop.permute.xlu0 %19
    %23 = vset.pattern.permute.xlu0 0
    %24 = vperm.xlu0 %23, %v15
    %v25 = vpop.permute.xlu0 %24
    %v28 = vperm.slane %v16, 0
    %v30 = vmul.f32 %v20, %v28
    %v31 = vmul.f32 %v25, %v28
    %v32 = vand.u32 2147483647, %v30
    %vm33 = vcmp.le.f32.partialorder %v32, 0.7853982
    %vm34 = vcmp.lt.s32.totalorder %v30, 0
    %v35 = vand.u32 %v30, 2139095040
    %v36 = vshrl.u32 %v35, 23
    %v37 = vsub.s32 %v36, 127
    %v38 = vand.u32 2147483647, %v30
    %v39 = vand.u32 %v38, 8388607
    %v40 = vor.u32 %v39, 8388608
    %v41 = vsub.s32 0, %v40
    %v42 = vadd.s32 %v37, 1
    %vm43 = vcmp.gt.s32.totalorder %v42, 0
    %v44 = vsel %vm43, %v42, 0
    %v45 = vshrl.u32 %v44, 5
    %v46 = vand.u32 %v44, 31
    %v47 = vsub.s32 32, %v46
    %v48 = vshrl.u32 683565275, %v47
    %v49 = vshll.u32 683565275, %v46
    %v50 = vshrl.u32 2475754826, %v47
    %v51 = vor.u32 %v49, %v50
    %v52 = vshll.u32 2475754826, %v46
    %v53 = vshrl.u32 2131351028, %v47
    %v54 = vor.u32 %v52, %v53
    %v55 = vshll.u32 2131351028, %v46
    %v56 = vshrl.u32 2102212464, %v47
    %v57 = vor.u32 %v55, %v56
    %v58 = vshll.u32 2102212464, %v46
    %v59 = vshrl.u32 920167782, %v47
    %v60 = vor.u32 %v58, %v59
    %v61 = vshll.u32 920167782, %v46
    %v62 = vshrl.u32 1326507024, %v47
    %v63 = vor.u32 %v61, %v62
    %vm64 = vcmp.lt.s32.totalorder %v45, 1
    %vm65 = vcmp.lt.s32.totalorder %v45, 2
    %vm66 = vcmp.lt.s32.totalorder %v45, 3
    %vm67 = vcmp.lt.s32.totalorder %v45, 4
    %v68 = vsel %vm64, %v48, %v51
    %v69 = vsel %vm67, %v57, 2102212464
    %v70 = vsel %vm66, %v54, %v69
    %v71 = vsel %vm65, %v68, %v70
    %v72 = vsel %vm64, %v51, %v54
    %v73 = vsel %vm67, %v60, 920167782
    %v74 = vsel %vm66, %v57, %v73
    %v75 = vsel %vm65, %v72, %v74
    %v76 = vsel %vm64, %v54, %v57
    %v77 = vsel %vm67, %v63, 1326507024
    %v78 = vsel %vm66, %v60, %v77
    %v79 = vsel %vm65, %v76, %v78
    %v80 = vshll.u32 %v40, 8
    %v81 = vand.u32 %v80, 65535
    %v82 = vshrl.u32 %v80, 16
    %v83 = vand.u32 %v79, 65535
    %v84 = vshrl.u32 %v79, 16
    %v85 = vmul.u32 %v81, %v83
    %v86 = vmul.u32 %v81, %v84
    %v87 = vmul.u32 %v82, %v83
    %v88 = vmul.u32 %v82, %v84
    %v89 = vshll.u32 %v86, 16
    %v90 = vshrl.u32 %v86, 16
    %v91 = vshll.u32 %v87, 16
    %v92 = vshrl.u32 %v87, 16
    %vm93 = vc.u32 %v85, %v89
    %v94 = vsel %vm93, 1, 0
    %v95 = vadd.s32 %v85, %v89
    %v96 = vadd.s32 %v88, %v94
    %vm97 = vc.u32 %v95, %v91
    %v98 = vsel %vm97, 1, 0
    %v99 = vadd.s32 %v95, %v91
    %v100 = vadd.s32 %v96, %v98
    %v101 = vadd.s32 %v100, %v90
    %v102 = vadd.s32 %v101, %v92
    %v103 = vand.u32 %v80, 65535
    %v104 = vshrl.u32 %v80, 16
    %v105 = vand.u32 %v75, 65535
    %v106 = vshrl.u32 %v75, 16
    %v107 = vmul.u32 %v103, %v105
    %v108 = vmul.u32 %v103, %v106
    %v109 = vmul.u32 %v104, %v105
    %v110 = vmul.u32 %v104, %v106
    %v111 = vshll.u32 %v108, 16
    %v112 = vshrl.u32 %v108, 16
    %v113 = vshll.u32 %v109, 16
    %v114 = vshrl.u32 %v109, 16
    %vm115 = vc.u32 %v107, %v111
    %v116 = vsel %vm115, 1, 0
    %v117 = vadd.s32 %v107, %v111
    %v118 = vadd.s32 %v110, %v116
    %vm119 = vc.u32 %v117, %v113
    %v120 = vsel %vm119, 1, 0
    %v121 = vadd.s32 %v117, %v113
    %v122 = vadd.s32 %v118, %v120
    %v123 = vadd.s32 %v122, %v112
    %v124 = vadd.s32 %v123, %v114
    %v125 = vmul.u32 %v80, %v71
    %v126 = vadd.s32 %v102, %v121
    %vm127 = vc.u32 %v102, %v121
    %v128 = vadd.s32 %v124, 1
    %v129 = vsel %vm127, %v128, %v124
    %v130 = vadd.s32 %v125, %v129
    %v131 = vadd.s32 %v130, 536870912
    %v132 = vshrl.u32 %v131, 30
    %v133 = vshll.u32 %v132, 30
    %v134 = vsub.s32 %v130, %v133
    %vm135 = vcmp.lt.s32.totalorder %v134, 0
    %v136 = vsub.s32 0, %v134
    %v137 = vsel %vm135, %v136, %v134
    %v138 = vclz %v137
    %v139 = vsub.s32 %v138, 2
    %vm140 = vcmp.gt.s32.totalorder 0, %v139
    %v141 = vsel %vm140, 0, %v139
    %v142 = vsub.s32 32, %v141
    %v143 = vshll.u32 %v134, %v141
    %v144 = vshrl.u32 %v126, %v142
    %v145 = vor.u32 %v143, %v144
    %v146 = vsub.s32 4294967266, %v141
    %v147 = vadd.s32 %v146, 127
    %v148 = vshll.u32 %v147, 23
    %v149 = vor.u32 4788187, %v148
    %v150 = vand.u32 2147483647, %v149
    %v152 = vcvt.s32.f32 %v145
    %v153 = vmul.f32 %v152, %v150
    %v154 = vxor.u32 %v153, 2147483648
    %v155 = vsel %vm34, %v154, %v153
    %v156 = vsub.s32 4, %v132
    %v157 = vsel %vm34, %v156, %v132
    %v158 = vsel %vm33, %v30, %v155
    %v159 = vsel %vm33, 0, %v157
    %v160 = vmul.f32 %v158, %v158
    %v161 = vmul.f32 %v160, -0.001358992
    %v162 = vadd.f32 %v161, 0.041655596
    %v163 = vmul.f32 %v160, %v162
    %v164 = vadd.f32 %v163, -0.4999988
    %v165 = vmul.f32 %v160, %v164
    %v166 = vadd.f32 1.0, %v165
    %v167 = vmul.f32 %v158, %v158
    %v168 = vmul.f32 %v167, -0.00019511016
    %v169 = vadd.f32 %v168, 0.008332121
    %v170 = vmul.f32 %v167, %v169
    %v171 = vadd.f32 %v170, -0.16666654
    %v172 = vmul.f32 %v167, %v171
    %v173 = vadd.f32 %v172, 1.0
    %v174 = vmul.f32 %v173, %v158
    %vm175 = vweird.f32 %v30
    %v176 = vadd.s32 %v159, 3
    %v177 = vand.u32 %v176, 3
    %vm178 = vcmp.lt.s32.totalorder %v177, 2
    %vm179 = vcmp.eq.s32.totalorder %v177, 0
    %v180 = vxor.u32 %v174, 2147483648
    %v181 = vsel %vm179, %v166, %v180
    %vm182 = vcmp.eq.s32.totalorder %v177, 2
    %v183 = vxor.u32 %v166, 2147483648
    %v184 = vsel %vm182, %v183, %v174
    %v185 = vsel %vm178, %v181, %v184
    %v186 = vsel %vm175, nan, %v185
    %v187 = vand.u32 2147483647, %v31
    %vm188 = vcmp.le.f32.partialorder %v187, 0.7853982
    %vm189 = vcmp.lt.s32.totalorder %v31, 0
    %v190 = vand.u32 %v31, 2139095040
    %v191 = vshrl.u32 %v190, 23
    %v192 = vsub.s32 %v191, 127
    %v193 = vand.u32 2147483647, %v31
    %v194 = vand.u32 %v193, 8388607
    %v195 = vor.u32 %v194, 8388608
    %v196 = vsub.s32 0, %v195
    %v197 = vadd.s32 %v192, 1
    %vm198 = vcmp.gt.s32.totalorder %v197, 0
    %v199 = vsel %vm198, %v197, 0
    %v200 = vshrl.u32 %v199, 5
    %v201 = vand.u32 %v199, 31
    %v202 = vsub.s32 32, %v201
    %v203 = vshrl.u32 683565275, %v202
    %v204 = vshll.u32 683565275, %v201
    %v205 = vshrl.u32 2475754826, %v202
    %v206 = vor.u32 %v204, %v205
    %v207 = vshll.u32 2475754826, %v201
    %v208 = vshrl.u32 2131351028, %v202
    %v209 = vor.u32 %v207, %v208
    %v210 = vshll.u32 2131351028, %v201
    %v211 = vshrl.u32 2102212464, %v202
    %v212 = vor.u32 %v210, %v211
    %v213 = vshll.u32 2102212464, %v201
    %v214 = vshrl.u32 920167782, %v202
    %v215 = vor.u32 %v213, %v214
    %v216 = vshll.u32 920167782, %v201
    %v217 = vshrl.u32 1326507024, %v202
    %v218 = vor.u32 %v216, %v217
    %vm219 = vcmp.lt.s32.totalorder %v200, 1
    %vm220 = vcmp.lt.s32.totalorder %v200, 2
    %vm221 = vcmp.lt.s32.totalorder %v200, 3
    %vm222 = vcmp.lt.s32.totalorder %v200, 4
    %v223 = vsel %vm219, %v203, %v206
    %v224 = vsel %vm222, %v212, 2102212464
    %v225 = vsel %vm221, %v209, %v224
    %v226 = vsel %vm220, %v223, %v225
    %v227 = vsel %vm219, %v206, %v209
    %v228 = vsel %vm222, %v215, 920167782
    %v229 = vsel %vm221, %v212, %v228
    %v230 = vsel %vm220, %v227, %v229
    %v231 = vsel %vm219, %v209, %v212
    %v232 = vsel %vm222, %v218, 1326507024
    %v233 = vsel %vm221, %v215, %v232
    %v234 = vsel %vm220, %v231, %v233
    %v235 = vshll.u32 %v195, 8
    %v236 = vand.u32 %v235, 65535
    %v237 = vshrl.u32 %v235, 16
    %v238 = vand.u32 %v234, 65535
    %v239 = vshrl.u32 %v234, 16
    %v240 = vmul.u32 %v236, %v238
    %v241 = vmul.u32 %v236, %v239
    %v242 = vmul.u32 %v237, %v238
    %v243 = vmul.u32 %v237, %v239
    %v244 = vshll.u32 %v241, 16
    %v245 = vshrl.u32 %v241, 16
    %v246 = vshll.u32 %v242, 16
    %v247 = vshrl.u32 %v242, 16
    %vm248 = vc.u32 %v240, %v244
    %v249 = vsel %vm248, 1, 0
    %v250 = vadd.s32 %v240, %v244
    %v251 = vadd.s32 %v243, %v249
    %vm252 = vc.u32 %v250, %v246
    %v253 = vsel %vm252, 1, 0
    %v254 = vadd.s32 %v250, %v246
    %v255 = vadd.s32 %v251, %v253
    %v256 = vadd.s32 %v255, %v245
    %v257 = vadd.s32 %v256, %v247
    %v258 = vand.u32 %v235, 65535
    %v259 = vshrl.u32 %v235, 16
    %v260 = vand.u32 %v230, 65535
    %v261 = vshrl.u32 %v230, 16
    %v262 = vmul.u32 %v258, %v260
    %v263 = vmul.u32 %v258, %v261
    %v264 = vmul.u32 %v259, %v260
    %v265 = vmul.u32 %v259, %v261
    %v266 = vshll.u32 %v263, 16
    %v267 = vshrl.u32 %v263, 16
    %v268 = vshll.u32 %v264, 16
    %v269 = vshrl.u32 %v264, 16
    %vm270 = vc.u32 %v262, %v266
    %v271 = vsel %vm270, 1, 0
    %v272 = vadd.s32 %v262, %v266
    %v273 = vadd.s32 %v265, %v271
    %vm274 = vc.u32 %v272, %v268
    %v275 = vsel %vm274, 1, 0
    %v276 = vadd.s32 %v272, %v268
    %v277 = vadd.s32 %v273, %v275
    %v278 = vadd.s32 %v277, %v267
    %v279 = vadd.s32 %v278, %v269
    %v280 = vmul.u32 %v235, %v226
    %v281 = vadd.s32 %v257, %v276
    %vm282 = vc.u32 %v257, %v276
    %v283 = vadd.s32 %v279, 1
    %v284 = vsel %vm282, %v283, %v279
    %v285 = vadd.s32 %v280, %v284
    %v286 = vadd.s32 %v285, 536870912
    %v287 = vshrl.u32 %v286, 30
    %v288 = vshll.u32 %v287, 30
    %v289 = vsub.s32 %v285, %v288
    %vm290 = vcmp.lt.s32.totalorder %v289, 0
    %v291 = vsub.s32 0, %v289
    %v292 = vsel %vm290, %v291, %v289
    %v293 = vclz %v292
    %v294 = vsub.s32 %v293, 2
    %vm295 = vcmp.gt.s32.totalorder 0, %v294
    %v296 = vsel %vm295, 0, %v294
    %v297 = vsub.s32 32, %v296
    %v298 = vshll.u32 %v289, %v296
    %v299 = vshrl.u32 %v281, %v297
    %v300 = vor.u32 %v298, %v299
    %v301 = vsub.s32 4294967266, %v296
    %v302 = vadd.s32 %v301, 127
    %v303 = vshll.u32 %v302, 23
    %v304 = vor.u32 4788187, %v303
    %v305 = vand.u32 2147483647, %v304
    %v307 = vcvt.s32.f32 %v300
    %v308 = vmul.f32 %v307, %v305
    %v309 = vxor.u32 %v308, 2147483648
    %v310 = vsel %vm189, %v309, %v308
    %v311 = vsub.s32 4, %v287
    %v312 = vsel %vm189, %v311, %v287
    %v313 = vsel %vm188, %v31, %v310
    %v314 = vsel %vm188, 0, %v312
    %v315 = vmul.f32 %v313, %v313
    %v316 = vmul.f32 %v315, -0.001358992
    %v317 = vadd.f32 %v316, 0.041655596
    %v318 = vmul.f32 %v315, %v317
    %v319 = vadd.f32 %v318, -0.4999988
    %v320 = vmul.f32 %v315, %v319
    %v321 = vadd.f32 1.0, %v320
    %v322 = vmul.f32 %v313, %v313
    %v323 = vmul.f32 %v322, -0.00019511016
    %v324 = vadd.f32 %v323, 0.008332121
    %v325 = vmul.f32 %v322, %v324
    %v326 = vadd.f32 %v325, -0.16666654
    %v327 = vmul.f32 %v322, %v326
    %v328 = vadd.f32 %v327, 1.0
    %v329 = vmul.f32 %v328, %v313
    %vm330 = vweird.f32 %v31
    %v331 = vadd.s32 %v314, 3
    %v332 = vand.u32 %v331, 3
    %vm333 = vcmp.lt.s32.totalorder %v332, 2
    %vm334 = vcmp.eq.s32.totalorder %v332, 0
    %v335 = vxor.u32 %v329, 2147483648
    %v336 = vsel %vm334, %v321, %v335
    %vm337 = vcmp.eq.s32.totalorder %v332, 2
    %v338 = vxor.u32 %v321, 2147483648
    %v339 = vsel %vm337, %v338, %v329
    %v340 = vsel %vm333, %v336, %v339
    %v341 = vsel %vm330, nan, %v340
    %342 = vst [vmem:[#allocation2] sm:$0xff] %v186
    %343 = vst [vmem:[#allocation2 + $0x8] sm:$0xff] %v341
    %v344 = vand.u32 2147483647, %v30
    %vm345 = vcmp.le.f32.partialorder %v344, 0.7853982
    %vm346 = vcmp.lt.s32.totalorder %v30, 0
    %v347 = vand.u32 %v30, 2139095040
    %v348 = vshrl.u32 %v347, 23
    %v349 = vsub.s32 %v348, 127
    %v350 = vand.u32 2147483647, %v30
    %v351 = vand.u32 %v350, 8388607
    %v352 = vor.u32 %v351, 8388608
    %v353 = vsub.s32 0, %v352
    %v354 = vadd.s32 %v349, 1
    %vm355 = vcmp.gt.s32.totalorder %v354, 0
    %v356 = vsel %vm355, %v354, 0
    %v357 = vshrl.u32 %v356, 5
    %v358 = vand.u32 %v356, 31
    %v359 = vsub.s32 32, %v358
    %v360 = vshrl.u32 683565275, %v359
    %v361 = vshll.u32 683565275, %v358
    %v362 = vshrl.u32 2475754826, %v359
    %v363 = vor.u32 %v361, %v362
    %v364 = vshll.u32 2475754826, %v358
    %v365 = vshrl.u32 2131351028, %v359
    %v366 = vor.u32 %v364, %v365
    %v367 = vshll.u32 2131351028, %v358
    %v368 = vshrl.u32 2102212464, %v359
    %v369 = vor.u32 %v367, %v368
    %v370 = vshll.u32 2102212464, %v358
    %v371 = vshrl.u32 920167782, %v359
    %v372 = vor.u32 %v370, %v371
    %v373 = vshll.u32 920167782, %v358
    %v374 = vshrl.u32 1326507024, %v359
    %v375 = vor.u32 %v373, %v374
    %vm376 = vcmp.lt.s32.totalorder %v357, 1
    %vm377 = vcmp.lt.s32.totalorder %v357, 2
    %vm378 = vcmp.lt.s32.totalorder %v357, 3
    %vm379 = vcmp.lt.s32.totalorder %v357, 4
    %v380 = vsel %vm376, %v360, %v363
    %v381 = vsel %vm379, %v369, 2102212464
    %v382 = vsel %vm378, %v366, %v381
    %v383 = vsel %vm377, %v380, %v382
    %v384 = vsel %vm376, %v363, %v366
    %v385 = vsel %vm379, %v372, 920167782
    %v386 = vsel %vm378, %v369, %v385
    %v387 = vsel %vm377, %v384, %v386
    %v388 = vsel %vm376, %v366, %v369
    %v389 = vsel %vm379, %v375, 1326507024
    %v390 = vsel %vm378, %v372, %v389
    %v391 = vsel %vm377, %v388, %v390
    %v392 = vshll.u32 %v352, 8
    %v393 = vand.u32 %v392, 65535
    %v394 = vshrl.u32 %v392, 16
    %v395 = vand.u32 %v391, 65535
    %v396 = vshrl.u32 %v391, 16
    %v397 = vmul.u32 %v393, %v395
    %v398 = vmul.u32 %v393, %v396
    %v399 = vmul.u32 %v394, %v395
    %v400 = vmul.u32 %v394, %v396
    %v401 = vshll.u32 %v398, 16
    %v402 = vshrl.u32 %v398, 16
    %v403 = vshll.u32 %v399, 16
    %v404 = vshrl.u32 %v399, 16
    %vm405 = vc.u32 %v397, %v401
    %v406 = vsel %vm405, 1, 0
    %v407 = vadd.s32 %v397, %v401
    %v408 = vadd.s32 %v400, %v406
    %vm409 = vc.u32 %v407, %v403
    %v410 = vsel %vm409, 1, 0
    %v411 = vadd.s32 %v407, %v403
    %v412 = vadd.s32 %v408, %v410
    %v413 = vadd.s32 %v412, %v402
    %v414 = vadd.s32 %v413, %v404
    %v415 = vand.u32 %v392, 65535
    %v416 = vshrl.u32 %v392, 16
    %v417 = vand.u32 %v387, 65535
    %v418 = vshrl.u32 %v387, 16
    %v419 = vmul.u32 %v415, %v417
    %v420 = vmul.u32 %v415, %v418
    %v421 = vmul.u32 %v416, %v417
    %v422 = vmul.u32 %v416, %v418
    %v423 = vshll.u32 %v420, 16
    %v424 = vshrl.u32 %v420, 16
    %v425 = vshll.u32 %v421, 16
    %v426 = vshrl.u32 %v421, 16
    %vm427 = vc.u32 %v419, %v423
    %v428 = vsel %vm427, 1, 0
    %v429 = vadd.s32 %v419, %v423
    %v430 = vadd.s32 %v422, %v428
    %vm431 = vc.u32 %v429, %v425
    %v432 = vsel %vm431, 1, 0
    %v433 = vadd.s32 %v429, %v425
    %v434 = vadd.s32 %v430, %v432
    %v435 = vadd.s32 %v434, %v424
    %v436 = vadd.s32 %v435, %v426
    %v437 = vmul.u32 %v392, %v383
    %v438 = vadd.s32 %v414, %v433
    %vm439 = vc.u32 %v414, %v433
    %v440 = vadd.s32 %v436, 1
    %v441 = vsel %vm439, %v440, %v436
    %v442 = vadd.s32 %v437, %v441
    %v443 = vadd.s32 %v442, 536870912
    %v444 = vshrl.u32 %v443, 30
    %v445 = vshll.u32 %v444, 30
    %v446 = vsub.s32 %v442, %v445
    %vm447 = vcmp.lt.s32.totalorder %v446, 0
    %v448 = vsub.s32 0, %v446
    %v449 = vsel %vm447, %v448, %v446
    %v450 = vclz %v449
    %v451 = vsub.s32 %v450, 2
    %vm452 = vcmp.gt.s32.totalorder 0, %v451
    %v453 = vsel %vm452, 0, %v451
    %v454 = vsub.s32 32, %v453
    %v455 = vshll.u32 %v446, %v453
    %v456 = vshrl.u32 %v438, %v454
    %v457 = vor.u32 %v455, %v456
    %v458 = vsub.s32 4294967266, %v453
    %v459 = vadd.s32 %v458, 127
    %v460 = vshll.u32 %v459, 23
    %v461 = vor.u32 4788187, %v460
    %v462 = vand.u32 2147483647, %v461
    %v464 = vcvt.s32.f32 %v457
    %v465 = vmul.f32 %v464, %v462
    %v466 = vxor.u32 %v465, 2147483648
    %v467 = vsel %vm346, %v466, %v465
    %v468 = vsub.s32 4, %v444
    %v469 = vsel %vm346, %v468, %v444
    %v470 = vsel %vm345, %v30, %v467
    %v471 = vsel %vm345, 0, %v469
    %v472 = vmul.f32 %v470, %v470
    %v473 = vmul.f32 %v472, -0.001358992
    %v474 = vadd.f32 %v473, 0.041655596
    %v475 = vmul.f32 %v472, %v474
    %v476 = vadd.f32 %v475, -0.4999988
    %v477 = vmul.f32 %v472, %v476
    %v478 = vadd.f32 1.0, %v477
    %v479 = vmul.f32 %v470, %v470
    %v480 = vmul.f32 %v479, -0.00019511016
    %v481 = vadd.f32 %v480, 0.008332121
    %v482 = vmul.f32 %v479, %v481
    %v483 = vadd.f32 %v482, -0.16666654
    %v484 = vmul.f32 %v479, %v483
    %v485 = vadd.f32 %v484, 1.0
    %v486 = vmul.f32 %v485, %v470
    %vm487 = vweird.f32 %v30
    %v488 = vand.u32 %v471, 3
    %vm489 = vcmp.lt.s32.totalorder %v488, 2
    %vm490 = vcmp.eq.s32.totalorder %v488, 0
    %v491 = vxor.u32 %v486, 2147483648
    %v492 = vsel %vm490, %v478, %v491
    %vm493 = vcmp.eq.s32.totalorder %v488, 2
    %v494 = vxor.u32 %v478, 2147483648
    %v495 = vsel %vm493, %v494, %v486
    %v496 = vsel %vm489, %v492, %v495
    %v497 = vsel %vm487, nan, %v496
    %v498 = vand.u32 2147483647, %v31
    %vm499 = vcmp.le.f32.partialorder %v498, 0.7853982
    %vm500 = vcmp.lt.s32.totalorder %v31, 0
    %v501 = vand.u32 %v31, 2139095040
    %v502 = vshrl.u32 %v501, 23
    %v503 = vsub.s32 %v502, 127
    %v504 = vand.u32 2147483647, %v31
    %v505 = vand.u32 %v504, 8388607
    %v506 = vor.u32 %v505, 8388608
    %v507 = vsub.s32 0, %v506
    %v508 = vadd.s32 %v503, 1
    %vm509 = vcmp.gt.s32.totalorder %v508, 0
    %v510 = vsel %vm509, %v508, 0
    %v511 = vshrl.u32 %v510, 5
    %v512 = vand.u32 %v510, 31
    %v513 = vsub.s32 32, %v512
    %v514 = vshrl.u32 683565275, %v513
    %v515 = vshll.u32 683565275, %v512
    %v516 = vshrl.u32 2475754826, %v513
    %v517 = vor.u32 %v515, %v516
    %v518 = vshll.u32 2475754826, %v512
    %v519 = vshrl.u32 2131351028, %v513
    %v520 = vor.u32 %v518, %v519
    %v521 = vshll.u32 2131351028, %v512
    %v522 = vshrl.u32 2102212464, %v513
    %v523 = vor.u32 %v521, %v522
    %v524 = vshll.u32 2102212464, %v512
    %v525 = vshrl.u32 920167782, %v513
    %v526 = vor.u32 %v524, %v525
    %v527 = vshll.u32 920167782, %v512
    %v528 = vshrl.u32 1326507024, %v513
    %v529 = vor.u32 %v527, %v528
    %vm530 = vcmp.lt.s32.totalorder %v511, 1
    %vm531 = vcmp.lt.s32.totalorder %v511, 2
    %vm532 = vcmp.lt.s32.totalorder %v511, 3
    %vm533 = vcmp.lt.s32.totalorder %v511, 4
    %v534 = vsel %vm530, %v514, %v517
    %v535 = vsel %vm533, %v523, 2102212464
    %v536 = vsel %vm532, %v520, %v535
    %v537 = vsel %vm531, %v534, %v536
    %v538 = vsel %vm530, %v517, %v520
    %v539 = vsel %vm533, %v526, 920167782
    %v540 = vsel %vm532, %v523, %v539
    %v541 = vsel %vm531, %v538, %v540
    %v542 = vsel %vm530, %v520, %v523
    %v543 = vsel %vm533, %v529, 1326507024
    %v544 = vsel %vm532, %v526, %v543
    %v545 = vsel %vm531, %v542, %v544
    %v546 = vshll.u32 %v506, 8
    %v547 = vand.u32 %v546, 65535
    %v548 = vshrl.u32 %v546, 16
    %v549 = vand.u32 %v545, 65535
    %v550 = vshrl.u32 %v545, 16
    %v551 = vmul.u32 %v547, %v549
    %v552 = vmul.u32 %v547, %v550
    %v553 = vmul.u32 %v548, %v549
    %v554 = vmul.u32 %v548, %v550
    %v555 = vshll.u32 %v552, 16
    %v556 = vshrl.u32 %v552, 16
    %v557 = vshll.u32 %v553, 16
    %v558 = vshrl.u32 %v553, 16
    %vm559 = vc.u32 %v551, %v555
    %v560 = vsel %vm559, 1, 0
    %v561 = vadd.s32 %v551, %v555
    %v562 = vadd.s32 %v554, %v560
    %vm563 = vc.u32 %v561, %v557
    %v564 = vsel %vm563, 1, 0
    %v565 = vadd.s32 %v561, %v557
    %v566 = vadd.s32 %v562, %v564
    %v567 = vadd.s32 %v566, %v556
    %v568 = vadd.s32 %v567, %v558
    %v569 = vand.u32 %v546, 65535
    %v570 = vshrl.u32 %v546, 16
    %v571 = vand.u32 %v541, 65535
    %v572 = vshrl.u32 %v541, 16
    %v573 = vmul.u32 %v569, %v571
    %v574 = vmul.u32 %v569, %v572
    %v575 = vmul.u32 %v570, %v571
    %v576 = vmul.u32 %v570, %v572
    %v577 = vshll.u32 %v574, 16
    %v578 = vshrl.u32 %v574, 16
    %v579 = vshll.u32 %v575, 16
    %v580 = vshrl.u32 %v575, 16
    %vm581 = vc.u32 %v573, %v577
    %v582 = vsel %vm581, 1, 0
    %v583 = vadd.s32 %v573, %v577
    %v584 = vadd.s32 %v576, %v582
    %vm585 = vc.u32 %v583, %v579
    %v586 = vsel %vm585, 1, 0
    %v587 = vadd.s32 %v583, %v579
    %v588 = vadd.s32 %v584, %v586
    %v589 = vadd.s32 %v588, %v578
    %v590 = vadd.s32 %v589, %v580
    %v591 = vmul.u32 %v546, %v537
    %v592 = vadd.s32 %v568, %v587
    %vm593 = vc.u32 %v568, %v587
    %v594 = vadd.s32 %v590, 1
    %v595 = vsel %vm593, %v594, %v590
    %v596 = vadd.s32 %v591, %v595
    %v597 = vadd.s32 %v596, 536870912
    %v598 = vshrl.u32 %v597, 30
    %v599 = vshll.u32 %v598, 30
    %v600 = vsub.s32 %v596, %v599
    %vm601 = vcmp.lt.s32.totalorder %v600, 0
    %v602 = vsub.s32 0, %v600
    %v603 = vsel %vm601, %v602, %v600
    %v604 = vclz %v603
    %v605 = vsub.s32 %v604, 2
    %vm606 = vcmp.gt.s32.totalorder 0, %v605
    %v607 = vsel %vm606, 0, %v605
    %v608 = vsub.s32 32, %v607
    %v609 = vshll.u32 %v600, %v607
    %v610 = vshrl.u32 %v592, %v608
    %v611 = vor.u32 %v609, %v610
    %v612 = vsub.s32 4294967266, %v607
    %v613 = vadd.s32 %v612, 127
    %v614 = vshll.u32 %v613, 23
    %v615 = vor.u32 4788187, %v614
    %v616 = vand.u32 2147483647, %v615
    %v618 = vcvt.s32.f32 %v611
    %v619 = vmul.f32 %v618, %v616
    %v620 = vxor.u32 %v619, 2147483648
    %v621 = vsel %vm500, %v620, %v619
    %v622 = vsub.s32 4, %v598
    %v623 = vsel %vm500, %v622, %v598
    %v624 = vsel %vm499, %v31, %v621
    %v625 = vsel %vm499, 0, %v623
    %v626 = vmul.f32 %v624, %v624
    %v627 = vmul.f32 %v626, -0.001358992
    %v628 = vadd.f32 %v627, 0.041655596
    %v629 = vmul.f32 %v626, %v628
    %v630 = vadd.f32 %v629, -0.4999988
    %v631 = vmul.f32 %v626, %v630
    %v632 = vadd.f32 1.0, %v631
    %v633 = vmul.f32 %v624, %v624
    %v634 = vmul.f32 %v633, -0.00019511016
    %v635 = vadd.f32 %v634, 0.008332121
    %v636 = vmul.f32 %v633, %v635
    %v637 = vadd.f32 %v636, -0.16666654
    %v638 = vmul.f32 %v633, %v637
    %v639 = vadd.f32 %v638, 1.0
    %v640 = vmul.f32 %v639, %v624
    %vm641 = vweird.f32 %v31
    %v642 = vand.u32 %v625, 3
    %vm643 = vcmp.lt.s32.totalorder %v642, 2
    %vm644 = vcmp.eq.s32.totalorder %v642, 0
    %v645 = vxor.u32 %v640, 2147483648
    %v646 = vsel %vm644, %v632, %v645
    %vm647 = vcmp.eq.s32.totalorder %v642, 2
    %v648 = vxor.u32 %v632, 2147483648
    %v649 = vsel %vm647, %v648, %v640
    %v650 = vsel %vm643, %v646, %v649
    %v651 = vsel %vm641, nan, %v650
    %652 = vst [vmem:[#allocation2 + $0x10] sm:$0xff] %v497
    %653 = vst [vmem:[#allocation2 + $0x18] sm:$0xff] %v651
    // Predicated region
    $region10: #{tpu_custom_call.1} parent=1 // pred_check
      _
    $region11: #{tpu_custom_call.1} parent=1 // pred_check_branch
      %655 = sbr.rel (0) target = $region13
    $region12: #{tpu_custom_call.1} parent=1 // pred_region
      %657 = vsyncadd [#allocation3], 0
      %s658 = sshll.u32 [#allocation2], 4
      %s659 = int_to_ptr.vmem [resolvable:$true] %s658
      %s660 = sshll.u32 %s2, 4
      %s661 = int_to_ptr.hbm [resolvable:$true] %s660
      %666 = dma.vmem_to_hbm [thread:$0]  %s659, 512, %s661, [#allocation3], 128, 128, 8
    $region13: #{tpu_custom_call.1} parent=1 // pred_fallthru
      _
    // Predicated region
    $region14: #{tpu_custom_call.1} parent=1 // pred_check
      _
    $region15: #{tpu_custom_call.1} parent=1 // pred_check_branch
      %668 = sbr.rel (0) target = $region17
    $region16: #{tpu_custom_call.1} parent=1 // pred_region
      %670 = dma.done [#allocation3], 512
    $region17: #{tpu_custom_call.1} parent=1 // pred_fallthru
      _
    %671 = vsyncpa [#allocation3], 1

</llo_original>
